<compile_context>
chip_gen: v7x
topology: tpu7x:2x2x1
jax: 0.10.0
libtpu: 0.0.40
codegen_flags: <defaults>
</compile_context>

<pallas_src>
import functools

import numpy as np
import jax
import jax.numpy as jnp
from jax import lax
from jax.experimental import pallas as pl
from jax.experimental.pallas import tpu as pltpu

GROUPS = 32
EPS = 1e-6


# --------------------------------------------------------------------------
# In-kernel helpers
# --------------------------------------------------------------------------
def _gn_swish(v, scale, shift):
    """Precomputed GroupNorm affine + swish, computed in f32."""
    a = v.astype(jnp.float32) * scale + shift
    return a * jax.nn.sigmoid(a)


def _fill_padded_strip(pad_ref, main, halo_top, halo_bot, scale, shift, R, W, C):
    """Write GN-affine + swish activations of an (R+2)-row strip into the
    (R+2, W+2, C) bf16 padded scratch.  The conv zero-pads the ACTIVATION, so
    on the first/last strip the halo rows are forced to zero AFTER gn_swish
    (gn_swish(0) != 0).  Only the two 1-px halo columns are zeroed explicitly;
    the interior is overwritten."""
    s = pl.program_id(1)
    last = pl.num_programs(1) - 1
    zcol = jnp.zeros((R + 2, 1, C), pad_ref.dtype)
    pad_ref[:, 0:1, :] = zcol
    pad_ref[:, W + 1:W + 2, :] = zcol
    top = jnp.where(s == 0, 0.0, _gn_swish(halo_top, scale, shift))
    bot = jnp.where(s == last, 0.0, _gn_swish(halo_bot, scale, shift))
    pad_ref[0:1, 1:W + 1, :] = top.astype(pad_ref.dtype)
    pad_ref[R + 1:R + 2, 1:W + 1, :] = bot.astype(pad_ref.dtype)
    pad_ref[1:R + 1, 1:W + 1, :] = _gn_swish(main, scale, shift).astype(pad_ref.dtype)


def _im2col_matmul(pad_ref, col_ref, w_ref, R, W, C):
    """Pack the 9 conv taps into the bf16 im2col scratch (R*W, 9*C) (bf16->bf16
    moves) and do a single MXU matmul with K = 9*C (f32 accumulator)."""
    for ky in range(3):
        for kx in range(3):
            t = ky * 3 + kx
            col_ref[:, t * C:(t + 1) * C] = (
                pad_ref[ky:ky + R, kx:kx + W, :].reshape(R * W, C).astype(col_ref.dtype))
    return jnp.dot(col_ref[...], w_ref[...], preferred_element_type=jnp.float32)


# --------------------------------------------------------------------------
# Stage 0: per-strip (sum, sumsq) for GroupNorm1 (single HBM pass over x)
# --------------------------------------------------------------------------
def _gn_stats_kernel(x_ref, st_ref, *, R, W, C):
    x = x_ref[0].astype(jnp.float32).reshape(R * W, C)
    st_ref[0, 0, 0:1, :] = jnp.sum(x, axis=0, keepdims=True)
    st_ref[0, 0, 1:2, :] = jnp.sum(x * x, axis=0, keepdims=True)


# --------------------------------------------------------------------------
# Stage 1: GN1(affine) -> swish -> conv1 (+ GN2 partial stats)
# --------------------------------------------------------------------------
def _stage1_kernel(xm_ref, xh_ref, s1_ref, t1_ref, w1_ref,
                   h_ref, st_ref, pad_ref, col_ref, *, R, W, Cin, Cout):
    scale = s1_ref[...]          # (1, 1, Cin)
    shift = t1_ref[...]
    _fill_padded_strip(pad_ref, xm_ref[0], xh_ref[0, 0, 0:1], xh_ref[0, 0, 1:2],
                       scale, shift, R, W, Cin)
    h = _im2col_matmul(pad_ref, col_ref, w1_ref, R, W, Cin)        # (R*W, Cout) f32
    # Per-strip per-channel partial sums for GroupNorm2, taken from the f32
    # accumulator before the bf16 staging cast (reduced in the wrapper).
    st_ref[0, 0, 0:1, :] = jnp.sum(h, axis=0, keepdims=True)
    st_ref[0, 0, 1:2, :] = jnp.sum(h * h, axis=0, keepdims=True)
    h_ref[0] = h.reshape(R, W, Cout).astype(h_ref.dtype)           # bf16 staging


# --------------------------------------------------------------------------
# Stage 2: GN2(affine) -> swish -> conv2 -> + shortcut
# --------------------------------------------------------------------------
def _make_stage2_kernel(has_proj, R, W, Cin, Cout):
    def kernel(*refs):
        if has_proj:
            (hm_ref, hh_ref, s2_ref, t2_ref, w2_ref, xm_ref, wsc_ref,
             o_ref, pad_ref, col_ref) = refs
        else:
            (hm_ref, hh_ref, s2_ref, t2_ref, w2_ref, xm_ref,
             o_ref, pad_ref, col_ref) = refs
            wsc_ref = None
        scale = s2_ref[...]
        shift = t2_ref[...]
        _fill_padded_strip(pad_ref, hm_ref[0], hh_ref[0, 0, 0:1], hh_ref[0, 0, 1:2],
                           scale, shift, R, W, Cout)
        y = _im2col_matmul(pad_ref, col_ref, w2_ref, R, W, Cout)   # (R*W, Cout) f32
        x2d = xm_ref[0].reshape(R * W, Cin)
        if has_proj:
            # nin_shortcut: 1x1 conv as a bf16 MXU matmul (no bias, as in the module).
            res = jnp.dot(x2d.astype(jnp.bfloat16), wsc_ref[...],
                          preferred_element_type=jnp.float32)
        else:
            # Identity shortcut: no matmul, no extra operand (Cin == Cout), f32.
            res = x2d.astype(jnp.float32)
        o_ref[0] = (y + res).reshape(R, W, Cout).astype(o_ref.dtype)
    return kernel


# --------------------------------------------------------------------------
# Host-side helpers
# --------------------------------------------------------------------------
def _strip_vmem_bytes(R, W, Cin, Cout):
    """Per-grid-step VMEM estimate (max over the two conv stages), including
    2x pipeline double-buffering of every BlockSpec'd operand."""
    f32, bf16 = 4, 2
    db = 2
    s1 = db * (R * W * Cin * f32            # x strip
               + 2 * W * Cin * f32          # x halo rows
               + 2 * Cin * f32              # GN1 scale + shift
               + 9 * Cin * Cout * bf16      # w1
               + R * W * Cout * bf16        # h strip out (bf16)
               + 2 * Cout * f32)            # GN2 partial sums out
    s1 += (R + 2) * (W + 2) * Cin * bf16 + R * W * 9 * Cin * bf16   # scratch
    s2 = db * (R * W * Cout * bf16          # h strip (bf16)
               + 2 * W * Cout * bf16        # h halo rows
               + 2 * Cout * f32             # GN2 scale + shift
               + 9 * Cout * Cout * bf16     # w2
               + R * W * Cin * f32          # residual x strip
               + Cin * Cout * bf16          # nin shortcut weight
               + R * W * Cout * f32)        # output strip
    s2 += (R + 2) * (W + 2) * Cout * bf16 + R * W * 9 * Cout * bf16
    return max(s1, s2)


def _vmem_budget(requested_limit):
    """Returns (per-step VMEM budget for strip sizing, explicit vmem_limit_bytes).
    Generation-aware: ~48/24 MiB budget on v5e,v6e / v7x; safe 12 MiB fallback
    when not running on a real TPU (e.g. interpret mode)."""
    try:
        cap = int(getattr(pltpu.get_tpu_info(), "vmem_capacity_bytes"))
    except Exception:
        cap = None
    if requested_limit is not None:
        limit = int(requested_limit)
    elif cap is not None:
        limit = cap * 3 // 4          # ~96 MiB on v5e/v6e (128 MiB), ~48 MiB on v7x (64 MiB/TC)
    else:
        limit = None                  # keep the compiler's scoped default
    if limit is not None:
        budget = limit // 2           # headroom for compiler-internal scratch / spills
    else:
        budget = 12 * 1024 * 1024     # fits under the 16 MiB v5e scoped default
    return budget, limit


def _pick_block_rows(H, W, Cin, Cout, requested, budget_bytes):
    if requested is not None:
        if requested < 1 or H % requested != 0:
            raise ValueError(f"block_rows={requested} must divide H={H}")
        return requested
    best = 1
    for d in range(1, H + 1):
        if H % d == 0 and _strip_vmem_bytes(d, W, Cin, Cout) <= budget_bytes:
            best = d
    # TODO(synk): masked short last strip (pl.when + bounded pl.ds) so awkward H
    # does not degrade to tiny divisors; also prefer R*W >= 256 (MXU M-dim on
    # v6e/v7x) and even N*S (v7x megacore) when the budget allows.
    return best


def _gn_affine_params(mean_g, var_g, gamma, beta):
    """Per-(sample, channel) scale/shift with y = x*scale + shift equal to
    (x - mean)/sqrt(var + eps) * gamma + beta."""
    N = mean_g.shape[0]
    C = gamma.shape[0]
    gsz = C // GROUPS
    rstd = lax.rsqrt(var_g + EPS)                       # (N, G)
    rstd_c = jnp.repeat(rstd, gsz, axis=1)              # (N, C)
    mean_c = jnp.repeat(mean_g, gsz, axis=1)
    scale = gamma[None, :] * rstd_c
    shift = beta[None, :] - scale * mean_c
    return (scale.reshape(N, 1, C).astype(jnp.float32),
            shift.reshape(N, 1, C).astype(jnp.float32))


def _gn_affine_from_stats(stats, gamma, beta, HW):
    """Reduce per-strip (sum, sumsq) partials (N, S, 2, C) to GroupNorm affine.
    Single-pass E[v^2]-E[v]^2, clamped at 0 (accepted precision trade-off)."""
    N = stats.shape[0]
    C = gamma.shape[0]
    gsz = C // GROUPS
    csum = jnp.sum(stats[:, :, 0, :], axis=1)                      # (N, C)
    csq = jnp.sum(stats[:, :, 1, :], axis=1)
    gsum = jnp.sum(csum.reshape(N, GROUPS, gsz), axis=2)           # (N, G)
    gsq = jnp.sum(csq.reshape(N, GROUPS, gsz), axis=2)
    n = HW * gsz
    mean = gsum / n
    var = jnp.maximum(gsq / n - mean * mean, 0.0)
    return _gn_affine_params(mean, var, gamma, beta)


def _halo_rows(a, R):
    """(N, H, W, C) -> (N, S, 2, W, C): the rows immediately above/below each
    R-row strip; zero rows at the image border (masked to zero activation
    in-kernel)."""
    N, H, W, C = a.shape
    S = H // R
    zrow = jnp.zeros((N, 1, W, C), a.dtype)
    if S > 1:
        tops = jnp.concatenate([zrow, a[:, R - 1:H - 1:R]], axis=1)   # (N, S, W, C)
        bots = jnp.concatenate([a[:, R:H:R], zrow], axis=1)
    else:
        tops = zrow
        bots = zrow
    return jnp.stack([tops, bots], axis=2)


# --------------------------------------------------------------------------
# Forward pass
# --------------------------------------------------------------------------
def resblock_forward_nhwc(x, params, *, block_rows=None, vmem_limit_bytes=None):
    """ResBlock forward.  x: (N, H, W, Cin) f32 NHWC -> (N, H, W, Cout) f32."""
    N, H, W, Cin = x.shape
    Cout = params["w1"].shape[-1]
    assert Cin % GROUPS == 0 and Cout % GROUPS == 0
    x = x.astype(jnp.float32)

    budget, vmem_limit = _vmem_budget(vmem_limit_bytes)
    R = _pick_block_rows(H, W, Cin, Cout, block_rows, budget)
    S = H // R

    cparams = dict(dimension_semantics=("parallel", "parallel"))
    if vmem_limit is not None:
        cparams["vmem_limit_bytes"] = int(vmem_limit)

    # ---------------- Stage 0: GN1 per-strip partial sums (one HBM pass over x)
    stats1 = pl.pallas_call(
        functools.partial(_gn_stats_kernel, R=R, W=W, C=Cin),
        out_shape=jax.ShapeDtypeStruct((N, S, 2, Cin), jnp.float32),
        grid_spec=pltpu.PrefetchScalarGridSpec(
            num_scalar_prefetch=0,
            grid=(N, S),
            in_specs=[pl.BlockSpec((1, R, W, Cin), lambda n, s: (n, s, 0, 0))],
            out_specs=pl.BlockSpec((1, 1, 2, Cin), lambda n, s: (n, s, 0, 0))),
        compiler_params=pltpu.CompilerParams(**cparams),
    )(x)
    scale1, shift1 = _gn_affine_from_stats(stats1, params["gamma1"], params["beta1"], H * W)

    # Conv weights: HWIO -> (9*C, Cout) in bf16 for the MXU (f32 accumulate).
    w1 = params["w1"].reshape(9 * Cin, Cout).astype(jnp.bfloat16)
    w2 = params["w2"].reshape(9 * Cout, Cout).astype(jnp.bfloat16)

    x_halo = _halo_rows(x, R)

    # ---------------- Stage 1: norm1 -> swish -> conv1 (+ GN2 partial sums)
    k1 = functools.partial(_stage1_kernel, R=R, W=W, Cin=Cin, Cout=Cout)
    h, stats2 = pl.pallas_call(
        k1,
        out_shape=(jax.ShapeDtypeStruct((N, H, W, Cout), jnp.bfloat16),   # bf16 staging
                   jax.ShapeDtypeStruct((N, S, 2, Cout), jnp.float32)),
        grid_spec=pltpu.PrefetchScalarGridSpec(
            num_scalar_prefetch=0,
            grid=(N, S),
            in_specs=[
                pl.BlockSpec((1, R, W, Cin), lambda n, s: (n, s, 0, 0)),
                pl.BlockSpec((1, 1, 2, W, Cin), lambda n, s: (n, s, 0, 0, 0)),
                pl.BlockSpec((1, 1, Cin), lambda n, s: (n, 0, 0)),
                pl.BlockSpec((1, 1, Cin), lambda n, s: (n, 0, 0)),
                pl.BlockSpec((9 * Cin, Cout), lambda n, s: (0, 0)),
            ],
            out_specs=[
                pl.BlockSpec((1, R, W, Cout), lambda n, s: (n, s, 0, 0)),
                pl.BlockSpec((1, 1, 2, Cout), lambda n, s: (n, s, 0, 0)),
            ],
            scratch_shapes=[
                pltpu.VMEM((R + 2, W + 2, Cin), jnp.bfloat16),    # padded activations (bf16)
                pltpu.VMEM((R * W, 9 * Cin), jnp.bfloat16),       # im2col (bf16)
            ]),
        compiler_params=pltpu.CompilerParams(**cparams),
    )(x, x_halo, scale1, shift1, w1)

    # GN2 affine from the per-strip partial sums (tiny JAX glue).
    scale2, shift2 = _gn_affine_from_stats(stats2, params["gamma2"], params["beta2"], H * W)

    h_halo = _halo_rows(h, R)

    # ---------------- Stage 2: norm2 -> swish -> conv2 -> + shortcut
    has_proj = (Cin != Cout)
    k2 = _make_stage2_kernel(has_proj, R, W, Cin, Cout)
    in_specs = [
        pl.BlockSpec((1, R, W, Cout), lambda n, s: (n, s, 0, 0)),
        pl.BlockSpec((1, 1, 2, W, Cout), lambda n, s: (n, s, 0, 0, 0)),
        pl.BlockSpec((1, 1, Cout), lambda n, s: (n, 0, 0)),
        pl.BlockSpec((1, 1, Cout), lambda n, s: (n, 0, 0)),
        pl.BlockSpec((9 * Cout, Cout), lambda n, s: (0, 0)),
        pl.BlockSpec((1, R, W, Cin), lambda n, s: (n, s, 0, 0)),
    ]
    operands = [h, h_halo, scale2, shift2, w2, x]
    if has_proj:
        wsc = params["w_nin"].reshape(Cin, Cout).astype(jnp.bfloat16)
        in_specs.append(pl.BlockSpec((Cin, Cout), lambda n, s: (0, 0)))
        operands.append(wsc)

    out = pl.pallas_call(
        k2,
        out_shape=jax.ShapeDtypeStruct((N, H, W, Cout), jnp.float32),
        grid_spec=pltpu.PrefetchScalarGridSpec(
            num_scalar_prefetch=0,
            grid=(N, S),
            in_specs=in_specs,
            out_specs=pl.BlockSpec((1, R, W, Cout), lambda n, s: (n, s, 0, 0)),
            scratch_shapes=[
                pltpu.VMEM((R + 2, W + 2, Cout), jnp.bfloat16),
                pltpu.VMEM((R * W, 9 * Cout), jnp.bfloat16),
            ]),
        compiler_params=pltpu.CompilerParams(**cparams),
    )(*operands)
    return out


def resblock_forward(x_nchw, params, *, block_rows=None, vmem_limit_bytes=None):
    """NCHW facade matching the PyTorch module interface.  When stacking blocks
    keep activations NHWC and call resblock_forward_nhwc directly (no HBM
    transposes per block)."""
    x = jnp.transpose(x_nchw, (0, 2, 3, 1))
    out = resblock_forward_nhwc(x, params, block_rows=block_rows,
                                vmem_limit_bytes=vmem_limit_bytes)
    return jnp.transpose(out, (0, 3, 1, 2))


# --------------------------------------------------------------------------
# Pure-JAX reference mirroring the PyTorch module
# --------------------------------------------------------------------------
def resblock_reference(x_nchw, params):
    def gn(x, gamma, beta):
        N, C, H, W = x.shape
        xr = x.reshape(N, GROUPS, C // GROUPS, H, W)
        mean = xr.mean(axis=(2, 3, 4), keepdims=True)
        var = xr.var(axis=(2, 3, 4), keepdims=True)
        xn = ((xr - mean) / jnp.sqrt(var + EPS)).reshape(N, C, H, W)
        return xn * gamma.reshape(1, C, 1, 1) + beta.reshape(1, C, 1, 1)

    def conv(x, w_hwio):
        return lax.conv_general_dilated(
            x, w_hwio, window_strides=(1, 1), padding="SAME",
            dimension_numbers=("NCHW", "HWIO", "NCHW"))

    swish = lambda v: v * jax.nn.sigmoid(v)
    h = conv(swish(gn(x_nchw, params["gamma1"], params["beta1"])), params["w1"])
    h = conv(swish(gn(h, params["gamma2"], params["beta2"])), params["w2"])
    Cin = x_nchw.shape[1]
    Cout = params["w1"].shape[-1]
    if Cin != Cout:
        res = conv(x_nchw, params["w_nin"].reshape(1, 1, Cin, Cout))
    else:
        res = x_nchw
    return h + res


# --------------------------------------------------------------------------
# Test
# --------------------------------------------------------------------------
def _make_params(key, Cin, Cout, with_nin):
    ks = jax.random.split(key, 7)
    p = {
        "gamma1": 1.0 + 0.1 * jax.random.normal(ks[0], (Cin,), jnp.float32),
        "beta1": 0.1 * jax.random.normal(ks[1], (Cin,), jnp.float32),
        "gamma2": 1.0 + 0.1 * jax.random.normal(ks[2], (Cout,), jnp.float32),
        "beta2": 0.1 * jax.random.normal(ks[3], (Cout,), jnp.float32),
        "w1": jax.random.normal(ks[4], (3, 3, Cin, Cout), jnp.float32) / np.sqrt(9 * Cin),
        "w2": jax.random.normal(ks[5], (3, 3, Cout, Cout), jnp.float32) / np.sqrt(9 * Cout),
    }
    if with_nin:
        p["w_nin"] = jax.random.normal(ks[6], (Cin, Cout), jnp.float32) / np.sqrt(Cin)
    return p


def _check(out, ref):
    out = np.asarray(out)
    ref = np.asarray(ref)
    # Loose element-wise tolerance (bf16 MXU operands + bf16 staged h) plus a
    # tight aggregate (Frobenius) check.
    np.testing.assert_allclose(out, ref, rtol=5e-2, atol=5e-2)
    rel = np.linalg.norm(out - ref) / np.linalg.norm(ref)
    assert rel < 2e-2, f"relative Frobenius error too large: {rel}"


if __name__ == "__main__":
    key = jax.random.PRNGKey(0)
    k_x1, k_p1, k_x2, k_p2 = jax.random.split(key, 4)

    # Case 1: channel change (nin_shortcut) + multi-strip grid (exercises halos
    # and the image-border activation masking).
    N, Cin, Cout, H, W = 2, 32, 64, 16, 16
    x1 = jax.random.normal(k_x1, (N, Cin, H, W), jnp.float32)
    p1 = _make_params(k_p1, Cin, Cout, with_nin=True)
    out1 = jax.block_until_ready(resblock_forward(x1, p1, block_rows=8))
    ref1 = jax.block_until_ready(resblock_reference(x1, p1))
    assert out1.shape == (N, Cout, H, W)
    _check(out1, ref1)

    # Case 2: identity shortcut (Cin == Cout), single-strip grid.
    x2 = jax.random.normal(k_x2, (1, 32, 16, 16), jnp.float32)
    p2 = _make_params(k_p2, 32, 32, with_nin=False)
    out2 = jax.block_until_ready(resblock_forward(x2, p2))
    ref2 = jax.block_until_ready(resblock_reference(x2, p2))
    assert out2.shape == (1, 32, 16, 16)
    _check(out2, ref2)

    print("KERNEL_OK")
</pallas_src>

<mosaic_0001>
module attributes {stable_mosaic.version = 11 : i64} {
  func.func @_gn_stats_kernel(%arg0: i32, %arg1: i32, %arg2: memref<1x8x16x32xf32, #tpu.memory_space<vmem>>, %arg3: memref<1x1x2x32xf32, #tpu.memory_space<vmem>>) attributes {dimension_semantics = [#tpu.dimension_semantics<parallel>, #tpu.dimension_semantics<parallel>], iteration_bounds = array<i64: 2, 2>, scalar_prefetch = 0 : i64, scratch_operands = 0 : i64, tpu.core_type = #tpu.core_type<tc>, window_params = [{transform_indices = @transform_0, window_bounds = array<i64: 1, 8, 16, 32>}, {transform_indices = @transform_1, window_bounds = array<i64: 1, 1, 2, 32>}]} {
    %c0 = arith.constant 0 : index
    %c0_0 = arith.constant 0 : index
    %c0_1 = arith.constant 0 : index
    %c0_2 = arith.constant 0 : index
    %0 = vector.load %arg2[%c0, %c0_0, %c0_1, %c0_2] : memref<1x8x16x32xf32, #tpu.memory_space<vmem>>, vector<1x8x16x32xf32>
    %1 = vector.shape_cast %0 : vector<1x8x16x32xf32> to vector<8x16x32xf32>
    %2 = vector.shape_cast %1 : vector<8x16x32xf32> to vector<128x32xf32>
    %cst = arith.constant dense<0.000000e+00> : vector<32xf32>
    %3 = vector.multi_reduction <add>, %2, %cst [0] : vector<128x32xf32> to vector<32xf32>
    %4 = vector.shape_cast %3 : vector<32xf32> to vector<1x32xf32>
    %c0_3 = arith.constant 0 : index
    %c0_4 = arith.constant 0 : index
    %c0_5 = arith.constant 0 : index
    %c0_6 = arith.constant 0 : index
    %5 = vector.load %arg3[%c0_3, %c0_4, %c0_5, %c0_6] : memref<1x1x2x32xf32, #tpu.memory_space<vmem>>, vector<1x1x1x32xf32>
    %6 = vector.shape_cast %5 : vector<1x1x1x32xf32> to vector<1x32xf32>
    %7 = vector.shape_cast %4 : vector<1x32xf32> to vector<1x1x1x32xf32>
    tpu.vector_store %arg3[%c0_3, %c0_4, %c0_5, %c0_6], %7 {strides = array<i32>} : memref<1x1x2x32xf32, #tpu.memory_space<vmem>>, vector<1x1x1x32xf32>,
    %8 = arith.mulf %2, %2 : vector<128x32xf32>
    %cst_7 = arith.constant dense<0.000000e+00> : vector<32xf32>
    %9 = vector.multi_reduction <add>, %8, %cst_7 [0] : vector<128x32xf32> to vector<32xf32>
    %10 = vector.shape_cast %9 : vector<32xf32> to vector<1x32xf32>
    %c0_8 = arith.constant 0 : index
    %c0_9 = arith.constant 0 : index
    %c1 = arith.constant 1 : index
    %c0_10 = arith.constant 0 : index
    %11 = vector.load %arg3[%c0_8, %c0_9, %c1, %c0_10] : memref<1x1x2x32xf32, #tpu.memory_space<vmem>>, vector<1x1x1x32xf32>
    %12 = vector.shape_cast %11 : vector<1x1x1x32xf32> to vector<1x32xf32>
    %13 = vector.shape_cast %10 : vector<1x32xf32> to vector<1x1x1x32xf32>
    tpu.vector_store %arg3[%c0_8, %c0_9, %c1, %c0_10], %13 {strides = array<i32>} : memref<1x1x2x32xf32, #tpu.memory_space<vmem>>, vector<1x1x1x32xf32>,
    return
  }
  func.func @transform_0(%arg0: i32, %arg1: i32) -> (i32, i32, i32, i32) {
    %c0_i32 = arith.constant 0 : i32
    %c0_i32_0 = arith.constant 0 : i32
    %c0_i32_1 = arith.constant 0 : i32
    return %arg0, %arg1, %c0_i32, %c0_i32_0 : i32, i32, i32, i32
  }
  func.func @transform_1(%arg0: i32, %arg1: i32) -> (i32, i32, i32, i32) {
    %c0_i32 = arith.constant 0 : i32
    %c0_i32_0 = arith.constant 0 : i32
    %c0_i32_1 = arith.constant 0 : i32
    return %arg0, %arg1, %c0_i32, %c0_i32_0 : i32, i32, i32, i32
  }
}

</mosaic_0001>

<llo_original>
// kernel: tpu_custom_call.1
$region0: #{tpu_custom_call.1}
  #allocation0 [shape = 'u32[]', space=smem, size = 0x4, offset = 0x4, fixed_abs, tag = 'smem constant byte address 0x4 - core index']
  #allocation1 [shape = 'u32[144,128]{1,0:T(1,128)}', space=vmem, size = 0x12000, scoped, tag = 'internal scratch']
  %s0 = inlined_call_operand.hbm [shape: f32[2,16,16,32], index: 0, kind: input, shape index: {}]
  %s1 = inlined_call_operand.hbm [shape: f32[2,2,2,32], index: 1, kind: output, shape index: {}]
  %s2 = sld [smem:[#allocation0]]
  $region41: #{tpu_custom_call.1} parent=0
    _
  %s4 = ssub.s32 1, %s2
  %s5 = scalar_select 0, %s4, %s2
  $region1: #{tpu_custom_call.1} parent=0
    #allocation2 [shape = 'u8[131072]{0}', space=vmem, size = 0x20000, scoped, tag = 'input window, operand 0']
    #allocation3 [shape = 's32[2]{0}', space=sflag, size = 0x8, scoped, tag = 'scoped memory for tpu_custom_call.1']
    #allocation4 [shape = 's32[2]{0}', space=sflag, size = 0x8, scoped, tag = 'scoped memory for tpu_custom_call.1']
    #allocation5 [shape = 'u8[2048]{0}', space=vmem, size = 0x800, scoped, tag = 'output window, operand 0']
    %6 = vsyncpa [#allocation3], 0
    %s7 = scalar_lea.sflag [#allocation3], 1
    %8 = vsyncpa %s7, 0
    %9 = vsyncpa [#allocation4], 0
    %s10 = scalar_lea.sflag [#allocation4], 1
    %11 = vsyncpa %s10, 0
    loop: start=0, step=1, limit=6
    $region2: #{tpu_custom_call.1} parent=1 // loop_pre_header
      _
    $region3: #{tpu_custom_call.1} parent=1 // loop_header
      %s13 = sphi 0, %s17
      %p14 = scmp.ge.s32.totalorder %s13, 6
      %s20 = sphi 0, %s32
      %s21 = sphi 0, %s28
      %s22 = sphi 0, %s20
      %s23 = sphi 0, %s21
      %s24 = sphi 0, %s22
      %s25 = sphi 0, %s23
      %s37 = sphi 0, %s39
      %s40 = sphi 0, %s37
      %s41 = sphi 0, %s40
      %s57 = sphi 0, %s41
      %s65 = sphi 0, %s67
      %s68 = sphi 0, %s65
      %s69 = sphi 0, %s68
      %s85 = sphi 0, %s69
    $region4: #{tpu_custom_call.1} parent=1 // loop_header_branch
      %16 = sbr.rel (%p14) target = $region8
    $region5: #{tpu_custom_call.1} parent=1 // loop_body
      %s18 = ssub.s32 %s13, 1
      %s19 = ssub.s32 %s13, 2
      %s26 = sadd.s32 1, %s21
      %p27 = scmp.ge.s32.totalorder %s26, 2
      %s28 = scalar_select %p27, 0, %s26
      %s29 = sadd.s32 1, %s20
      %s30 = scalar_select %p27, %s29, %s20
      %p31 = scmp.ge.s32.totalorder %s30, 2
      %s32 = scalar_select %p31, 0, %s30
      %s33 = ssub.s32 %s20, %s32
      %s34 = ssub.s32 %s21, %s28
      %s35 = sor.u32 %s33, %s34
      %p36 = scmp.eq.s32.totalorder %s35, 0
      %s38 = sadd.s32 %s37, 1
      %s39 = scalar_select %p36, %s37, %s38
      %p42 = pneg %p36
      %p43 = scmp.eq.s32.totalorder %s13, 3
      %p44 = por %p42, %p43
      %p45 = scmp.ne.s32.totalorder %s37, %s40
      %p46 = scmp.eq.s32.totalorder %s13, 0
      %p47 = por %p45, %p46
      %p48 = scmp.ne.s32.totalorder %s37, %s40
      %p49 = scmp.eq.s32.totalorder %s18, 3
      %p50 = por %p48, %p49
      %p51 = scmp.ne.s32.totalorder %s40, %s41
      %p52 = scmp.eq.s32.totalorder %s18, 0
      %p53 = por %p51, %p52
      %p54 = scmp.ne.s32.totalorder %s40, %s41
      %p55 = scmp.eq.s32.totalorder %s19, 3
      %p56 = por %p54, %p55
      %p58 = scmp.ne.s32.totalorder %s41, %s57
      %p59 = scmp.eq.s32.totalorder %s19, 0
      %p60 = por %p58, %p59
      %s61 = ssub.s32 %s20, %s32
      %s62 = ssub.s32 %s21, %s28
      %s63 = sor.u32 %s61, %s62
      %p64 = scmp.eq.s32.totalorder %s63, 0
      %s66 = sadd.s32 %s65, 1
      %s67 = scalar_select %p64, %s65, %s66
      %p70 = pneg %p64
      %p71 = scmp.eq.s32.totalorder %s13, 3
      %p72 = por %p70, %p71
      %p73 = scmp.ne.s32.totalorder %s65, %s68
      %p74 = scmp.eq.s32.totalorder %s13, 0
      %p75 = por %p73, %p74
      %p76 = scmp.ne.s32.totalorder %s65, %s68
      %p77 = scmp.eq.s32.totalorder %s18, 3
      %p78 = por %p76, %p77
      %p79 = scmp.ne.s32.totalorder %s68, %s69
      %p80 = scmp.eq.s32.totalorder %s18, 0
      %p81 = por %p79, %p80
      %p82 = scmp.ne.s32.totalorder %s68, %s69
      %p83 = scmp.eq.s32.totalorder %s19, 3
      %p84 = por %p82, %p83
      %p86 = scmp.ne.s32.totalorder %s69, %s85
      %p87 = scmp.eq.s32.totalorder %s19, 0
      %p88 = por %p86, %p87
      %p89 = scmp.le.s32.totalorder 1, %s13
      %p90 = scmp.lt.s32.totalorder %s13, 5
      %p91 = pnand %p89, %p90
      %p92 = pneg %p91
      // Predicated region
      $region9: #{tpu_custom_call.1} parent=5 // pred_check
        _
      $region10: #{tpu_custom_call.1} parent=5 // pred_check_branch
        %94 = sbr.rel (%p91) target = $region12
      $region11: #{tpu_custom_call.1} parent=5 // pred_region
        %s95 = ssub.s32 %s13, 1
      $region12: #{tpu_custom_call.1} parent=5 // pred_fallthru
        _
      %p96 = scmp.lt.s32.totalorder %s13, 4
      // Predicated region
      $region13: #{tpu_custom_call.1} parent=5 // pred_check
        %p97 = pneg %p96
      $region14: #{tpu_custom_call.1} parent=5 // pred_check_branch
        %99 = sbr.rel (%p97) target = $region16
      $region15: #{tpu_custom_call.1} parent=5 // pred_region
        // Predicated region
        $region17: #{tpu_custom_call.1} parent=15 // pred_check
          %p100 = pneg %p47
        $region18: #{tpu_custom_call.1} parent=15 // pred_check_branch
          %102 = sbr.rel (%p100) target = $region20
        $region19: #{tpu_custom_call.1} parent=15 // pred_region
          %s103 = sand.u32 %s37, 1
          %s104 = scalar_lea.sflag [#allocation3], %s103
          %s105 = sand.u32 %s37, 1
          %s106 = smul.addr %s105, 128
          %s107 = scalar_lea.vmem [#allocation2], %s106
          %s108 = smul.u32 8, %s21
          %s110 = ssub.s32 2048, 2048
          %111 = vsyncadd %s104, %s110
          %s112 = smul.addr %s108, 2
          %s113 = smul.addr %s20, 32
          %s114 = sadd.s32 %s112, %s113
          %s115 = smul.addr %s114, 128
          %s116 = scalar_lea.hbm %s0, %s115
          %s117 = sshll.u32 %s107, 4
          %s118 = int_to_ptr.vmem [resolvable:$true] %s117
          %123 = dma.hbm_to_vmem [thread:$0]  %s116, 2048, %s118, %s104, 128, 128, 8
        $region20: #{tpu_custom_call.1} parent=15 // pred_fallthru
          _
      $region16: #{tpu_custom_call.1} parent=5 // pred_fallthru
        _
      %p124 = scmp.le.s32.totalorder 1, %s13
      %p125 = scmp.lt.s32.totalorder %s13, 5
      %p126 = pnand %p124, %p125
      %p127 = pneg %p126
      // Predicated region
      $region21: #{tpu_custom_call.1} parent=5 // pred_check
        _
      $region22: #{tpu_custom_call.1} parent=5 // pred_check_branch
        %129 = sbr.rel (%p126) target = $region24
      $region23: #{tpu_custom_call.1} parent=5 // pred_region
        %s130 = ssub.s32 %s13, 1
        %s131 = sand.u32 %s40, 1
        %s132 = scalar_lea.sflag [#allocation3], %s131
        %s133 = sand.u32 %s40, 1
        %s134 = smul.addr %s133, 128
        %s135 = scalar_lea.vmem [#allocation2], %s134
        // Predicated region
        $region25: #{tpu_custom_call.1} parent=23 // pred_check
          %p136 = pneg %p53
        $region26: #{tpu_custom_call.1} parent=23 // pred_check_branch
          %138 = sbr.rel (%p136) target = $region28
        $region27: #{tpu_custom_call.1} parent=23 // pred_region
          %139 = dma.done %s132, 2048
        $region28: #{tpu_custom_call.1} parent=23 // pred_fallthru
          _
        %s140 = sand.u32 %s40, 1
        %s141 = scalar_lea.sflag [#allocation3], %s140
        %s142 = sand.u32 %s40, 1
        %s143 = smul.addr %s142, 128
        %s144 = scalar_lea.vmem [#allocation2], %s143
        %p145 = pneg %p53
        %p146 = pneg %p50
        %p147 = pneg %p81
        %p148 = pneg %p78
        %s149 = sand.u32 %s68, 1
        %s150 = scalar_lea.sflag [#allocation4], %s149
        %s151 = sand.u32 %s68, 1
        %s152 = smul.addr %s151, 2
        %s153 = scalar_lea.vmem [#allocation5], %s152
        %s154 = smul.u32 8, %s23
        %v155 = vld [vmem:[%s135] sm:$0xff]
        %v156 = vld [vmem:[%s135 + $0x8] sm:$0xff]
        %v157 = vld [vmem:[%s135 + $0x10] sm:$0xff]
        %v158 = vld [vmem:[%s135 + $0x18] sm:$0xff]
        %v159 = vld [vmem:[%s135 + $0x20] sm:$0xff]
        %v160 = vld [vmem:[%s135 + $0x28] sm:$0xff]
        %v161 = vld [vmem:[%s135 + $0x30] sm:$0xff]
        %v162 = vld [vmem:[%s135 + $0x38] sm:$0xff]
        %v163 = vld [vmem:[%s135 + $0x40] sm:$0xff]
        %v164 = vld [vmem:[%s135 + $0x48] sm:$0xff]
        %v165 = vld [vmem:[%s135 + $0x50] sm:$0xff]
        %v166 = vld [vmem:[%s135 + $0x58] sm:$0xff]
        %v167 = vld [vmem:[%s135 + $0x60] sm:$0xff]
        %v168 = vld [vmem:[%s135 + $0x68] sm:$0xff]
        %v169 = vld [vmem:[%s135 + $0x70] sm:$0xff]
        %v170 = vld [vmem:[%s135 + $0x78] sm:$0xff]
        %vm171 = vcmask 261120
        %v172 = vsel %vm171, %v155, 0.0
        %v173 = vsel %vm171, %v156, 0.0
        %v174 = vadd.f32 %v172, %v173
        %v175 = vsel %vm171, %v157, 0.0
        %v176 = vadd.f32 %v174, %v175
        %v177 = vsel %vm171, %v158, 0.0
        %v178 = vadd.f32 %v176, %v177
        %v179 = vsel %vm171, %v159, 0.0
        %v180 = vadd.f32 %v178, %v179
        %v181 = vsel %vm171, %v160, 0.0
        %v182 = vadd.f32 %v180, %v181
        %v183 = vsel %vm171, %v161, 0.0
        %v184 = vadd.f32 %v182, %v183
        %v185 = vsel %vm171, %v162, 0.0
        %v186 = vadd.f32 %v184, %v185
        %v187 = vsel %vm171, %v163, 0.0
        %v188 = vadd.f32 %v186, %v187
        %v189 = vsel %vm171, %v164, 0.0
        %v190 = vadd.f32 %v188, %v189
        %v191 = vsel %vm171, %v165, 0.0
        %v192 = vadd.f32 %v190, %v191
        %v193 = vsel %vm171, %v166, 0.0
        %v194 = vadd.f32 %v192, %v193
        %v195 = vsel %vm171, %v167, 0.0
        %v196 = vadd.f32 %v194, %v195
        %v197 = vsel %vm171, %v168, 0.0
        %v198 = vadd.f32 %v196, %v197
        %v199 = vsel %vm171, %v169, 0.0
        %v200 = vadd.f32 %v198, %v199
        %v201 = vsel %vm171, %v170, 0.0
        %v202 = vadd.f32 %v200, %v201
        %v203 = vrot.slane %v202, 4
        %v204 = vadd.f32 %v202, %v203
        %v205 = vrot.slane %v204, 2
        %v206 = vadd.f32 %v204, %v205
        %v207 = vrot.slane %v206, 1
        %v208 = vadd.f32 %v206, %v207
        %vm209 = vcmask 253952
        %210 = vst.msk [vmem:[%s153] sm:$0x1] %vm209, %v208
        %v211 = vmul.f32 %v155, %v155
        %v212 = vmul.f32 %v156, %v156
        %v213 = vmul.f32 %v157, %v157
        %v214 = vmul.f32 %v158, %v158
        %v215 = vmul.f32 %v159, %v159
        %v216 = vmul.f32 %v160, %v160
        %v217 = vmul.f32 %v161, %v161
        %v218 = vmul.f32 %v162, %v162
        %v219 = vmul.f32 %v163, %v163
        %v220 = vmul.f32 %v164, %v164
        %v221 = vmul.f32 %v165, %v165
        %v222 = vmul.f32 %v166, %v166
        %v223 = vmul.f32 %v167, %v167
        %v224 = vmul.f32 %v168, %v168
        %v225 = vmul.f32 %v169, %v169
        %v226 = vmul.f32 %v170, %v170
        %v227 = vsel %vm171, %v211, 0.0
        %v228 = vsel %vm171, %v212, 0.0
        %v229 = vadd.f32 %v227, %v228
        %v230 = vsel %vm171, %v213, 0.0
        %v231 = vadd.f32 %v229, %v230
        %v232 = vsel %vm171, %v214, 0.0
        %v233 = vadd.f32 %v231, %v232
        %v234 = vsel %vm171, %v215, 0.0
        %v235 = vadd.f32 %v233, %v234
        %v236 = vsel %vm171, %v216, 0.0
        %v237 = vadd.f32 %v235, %v236
        %v238 = vsel %vm171, %v217, 0.0
        %v239 = vadd.f32 %v237, %v238
        %v240 = vsel %vm171, %v218, 0.0
        %v241 = vadd.f32 %v239, %v240
        %v242 = vsel %vm171, %v219, 0.0
        %v243 = vadd.f32 %v241, %v242
        %v244 = vsel %vm171, %v220, 0.0
        %v245 = vadd.f32 %v243, %v244
        %v246 = vsel %vm171, %v221, 0.0
        %v247 = vadd.f32 %v245, %v246
        %v248 = vsel %vm171, %v222, 0.0
        %v249 = vadd.f32 %v247, %v248
        %v250 = vsel %vm171, %v223, 0.0
        %v251 = vadd.f32 %v249, %v250
        %v252 = vsel %vm171, %v224, 0.0
        %v253 = vadd.f32 %v251, %v252
        %v254 = vsel %vm171, %v225, 0.0
        %v255 = vadd.f32 %v253, %v254
        %v256 = vsel %vm171, %v226, 0.0
        %v257 = vadd.f32 %v255, %v256
        %v258 = vrot.slane %v257, 4
        %v259 = vadd.f32 %v257, %v258
        %v260 = vrot.slane %v259, 2
        %v261 = vadd.f32 %v259, %v260
        %v262 = vrot.slane %v261, 1
        %v263 = vadd.f32 %v261, %v262
        %264 = vst.msk [vmem:[%s153 + $0x1] sm:$0x1] %vm209, %v263
        %s265 = sand.u32 %s68, 1
        %s266 = scalar_lea.sflag [#allocation4], %s265
        %s267 = sand.u32 %s68, 1
        %s268 = smul.addr %s267, 2
        %s269 = scalar_lea.vmem [#allocation5], %s268
        // Predicated region
        $region29: #{tpu_custom_call.1} parent=23 // pred_check
          %p270 = pneg %p78
        $region30: #{tpu_custom_call.1} parent=23 // pred_check_branch
          %272 = sbr.rel (%p270) target = $region32
        $region31: #{tpu_custom_call.1} parent=23 // pred_region
          %s274 = ssub.s32 32, 32
          %275 = vsyncadd %s266, %s274
          %s276 = smul.addr %s22, 2
          %s277 = sadd.s32 %s23, %s276
          %s278 = smul.addr %s277, 32
          %s279 = scalar_lea.hbm %s1, %s278
          %s281 = sshll.u32 %s269, 4
          %s282 = int_to_ptr.vmem [resolvable:$true] %s281
          %284 = dma.vmem_to_hbm [thread:$0]  %s282, 32, %s279, %s266
        $region32: #{tpu_custom_call.1} parent=23 // pred_fallthru
          _
      $region24: #{tpu_custom_call.1} parent=5 // pred_fallthru
        _
      %p285 = scmp.le.s32.totalorder 2, %s13
      // Predicated region
      $region33: #{tpu_custom_call.1} parent=5 // pred_check
        %p286 = pneg %p285
      $region34: #{tpu_custom_call.1} parent=5 // pred_check_branch
        %288 = sbr.rel (%p286) target = $region36
      $region35: #{tpu_custom_call.1} parent=5 // pred_region
        %s289 = ssub.s32 %s13, 2
        // Predicated region
        $region37: #{tpu_custom_call.1} parent=35 // pred_check
          %p290 = pneg %p84
        $region38: #{tpu_custom_call.1} parent=35 // pred_check_branch
          %292 = sbr.rel (%p290) target = $region40
        $region39: #{tpu_custom_call.1} parent=35 // pred_region
          %s293 = sand.u32 %s69, 1
          %s294 = scalar_lea.sflag [#allocation4], %s293
          %s295 = sand.u32 %s69, 1
          %s296 = smul.addr %s295, 2
          %s297 = scalar_lea.vmem [#allocation5], %s296
          %298 = dma.done %s294, 32
        $region40: #{tpu_custom_call.1} parent=35 // pred_fallthru
          _
      $region36: #{tpu_custom_call.1} parent=5 // pred_fallthru
        _
    $region6: #{tpu_custom_call.1} parent=1 // loop_footer
      %s17 = sadd.s32 1, %s13
    $region7: #{tpu_custom_call.1} parent=1 // loop_footer_branch
      %12 = sbr.rel target = $region3
    $region8: #{tpu_custom_call.1} parent=1 // loop_exit
      _
    %299 = vsyncpa [#allocation3], 1
    %s300 = scalar_lea.sflag [#allocation3], 1
    %301 = vsyncpa %s300, 1
    %302 = vsyncpa [#allocation4], 1
    %s303 = scalar_lea.sflag [#allocation4], 1
    %304 = vsyncpa %s303, 1

</llo_original>
